<compile_context>
chip_gen: v7x
topology: tpu7x:2x2x1
jax: 0.10.0
libtpu: 0.0.40
codegen_flags: <defaults>
</compile_context>

<pallas_src>
import functools

import jax
import jax.numpy as jnp
from jax.experimental import pallas as pl
from jax.experimental.pallas import tpu as pltpu


_MAX_BLOCK_ROWS = 512                    # sublane cap per tile
_MAX_TILE_BYTES = 4 * 1024 * 1024        # ~4 MiB per data tile, dtype-agnostic
_MIN_SPLIT_BYTES = 1 * 1024 * 1024       # force >=2 grid steps only for slabs >= 1 MiB
_VMEM_LIMIT_BYTES = 48 * 1024 * 1024     # headroom; < v7x 64 MiB physical VMEM


def _round_up(x: int, m: int) -> int:
    return ((x + m - 1) // m) * m


def _sublane_multiple(dtype) -> int:
    # 8 for f32, 16 for bf16, 32 for int8/fp8: full sublane packing.
    return max(8, 32 // jnp.dtype(dtype).itemsize)


def _layerscaler_kernel(g_ref, x_ref, o_ref, *, compute_dtype):
    # g_ref: (block_rows, 1) f32 tile of per-row scales.
    # x_ref: (block_rows, block_cols) tile of the data slab.
    g = g_ref[...].astype(compute_dtype)
    x = x_ref[...].astype(compute_dtype)
    o_ref[...] = (g * x).astype(o_ref.dtype)


def layer_scaler(x: jax.Array, gamma: jax.Array) -> jax.Array:
    """out = gamma[None, :, None, None] * x for NCHW x, gamma of shape (C,)."""
    N, C, H, W = x.shape
    assert gamma.shape == (C,)
    R, HW = N * C, H * W

    itemsize = jnp.dtype(x.dtype).itemsize
    sub = _sublane_multiple(x.dtype)

    # Only pad when the spatial extent is narrower than one lane group; every
    # other non-divisible shape is handled by masked edge blocks (no HBM copy).
    pad_cols = 0
    HW_eff = HW
    if HW < 128:
        HW_eff = 128
        pad_cols = HW_eff - HW

    # Byte-based tile caps (~4 MiB per tile), no exact-divisor search.
    block_rows = min(_MAX_BLOCK_ROWS, _round_up(R, sub))
    col_cap = max(128, (_MAX_TILE_BYTES // (block_rows * itemsize)) // 128 * 128)
    block_cols = min(col_cap, _round_up(HW_eff, 128))

    # v7x: guarantee >= 2 "parallel" grid steps for large slabs so both
    # TensorCores stream HBM (grid steps shard across cores).
    if R * HW_eff * itemsize >= _MIN_SPLIT_BYTES:
        while pl.cdiv(R, block_rows) * pl.cdiv(HW_eff, block_cols) < 2:
            if block_cols >= 2 * 128:
                block_cols = _round_up(block_cols // 2, 128)
            elif block_rows >= 2 * sub:
                block_rows = _round_up(block_rows // 2, sub)
            else:
                break

    grid = (pl.cdiv(R, block_rows), pl.cdiv(HW_eff, block_cols))

    # Plain-JAX glue: flatten NCHW -> (R, HW); one f32 scale per row (tiny).
    x2 = x.reshape(R, HW)
    if pad_cols:
        x2 = jnp.pad(x2, ((0, 0), (0, pad_cols)))
    g2 = jnp.broadcast_to(gamma[None, :], (N, C)).reshape(R, 1).astype(jnp.float32)

    # Native-dtype math for 16/32-bit floats (output dtype anyway); f32 otherwise.
    if jnp.issubdtype(x.dtype, jnp.floating) and itemsize >= 2:
        compute_dtype = x.dtype
    else:
        compute_dtype = jnp.float32

    kernel = functools.partial(_layerscaler_kernel, compute_dtype=compute_dtype)
    out2 = pl.pallas_call(
        kernel,
        out_shape=jax.ShapeDtypeStruct((R, HW_eff), x.dtype),
        grid=grid,
        in_specs=[
            # gamma: tiled per grid-row, tiny VMEM footprint.
            pl.BlockSpec((block_rows, 1), lambda i, j: (i, 0)),
            pl.BlockSpec((block_rows, block_cols), lambda i, j: (i, j)),
        ],
        out_specs=pl.BlockSpec((block_rows, block_cols), lambda i, j: (i, j)),
        compiler_params=pltpu.CompilerParams(
            dimension_semantics=("parallel", "parallel"),
            vmem_limit_bytes=_VMEM_LIMIT_BYTES,
        ),
    )(g2, x2)

    if pad_cols:
        out2 = out2[:, :HW]
    return out2.reshape(N, C, H, W)


if __name__ == "__main__":
    # Module config: LayerScaler(init_value=1e-6, dimensions=C)
    init_value = 1e-6
    key = jax.random.PRNGKey(0)

    def ref_fn(x, gamma):
        out = gamma.astype(jnp.float32)[None, :, None, None] * x.astype(jnp.float32)
        return out.astype(x.dtype)

    # 1) Module-sized f32 input (lane-divisible path).
    N, C, H, W = 2, 4, 16, 16
    x = jax.random.normal(key, (N, C, H, W), dtype=jnp.float32)
    gamma = init_value * jnp.ones((C,), dtype=jnp.float32)
    out = jax.block_until_ready(layer_scaler(x, gamma))
    assert out.shape == x.shape and out.dtype == x.dtype
    assert jnp.allclose(out, ref_fn(x, gamma), atol=1e-7, rtol=1e-6), "f32 mismatch"

    # 2) Non-128-divisible spatial size (HW = 49 < 128 exercises the narrow pad path).
    x_small = jax.random.normal(jax.random.PRNGKey(1), (2, 4, 7, 7), dtype=jnp.float32)
    out_small = jax.block_until_ready(layer_scaler(x_small, gamma))
    assert out_small.shape == x_small.shape
    assert jnp.allclose(out_small, ref_fn(x_small, gamma), atol=1e-7, rtol=1e-6), \
        "padded-shape mismatch"

    # 3) Larger non-divisible spatial size (masked edge blocks, no wrapper pad/copy).
    x_ragged = jax.random.normal(jax.random.PRNGKey(3), (2, 4, 18, 18), dtype=jnp.float32)
    out_ragged = jax.block_until_ready(layer_scaler(x_ragged, gamma))
    assert out_ragged.shape == x_ragged.shape
    assert jnp.allclose(out_ragged, ref_fn(x_ragged, gamma), atol=1e-7, rtol=1e-6), \
        "masked-edge mismatch"

    # 4) bf16 activations (native bf16 multiply; gamma stored f32, cast per-tile).
    x_bf16 = jax.random.normal(jax.random.PRNGKey(2), (N, C, H, W), dtype=jnp.bfloat16)
    out_bf16 = jax.block_until_ready(layer_scaler(x_bf16, gamma))
    assert out_bf16.shape == x_bf16.shape and out_bf16.dtype == jnp.bfloat16
    assert jnp.allclose(out_bf16.astype(jnp.float32),
                        ref_fn(x_bf16, gamma).astype(jnp.float32),
                        atol=1e-8, rtol=1e-2), "bf16 mismatch"

    print("KERNEL_OK")
</pallas_src>

<mosaic_0001>
module attributes {stable_mosaic.version = 11 : i64} {
  func.func @_layerscaler_kernel(%arg0: i32, %arg1: i32, %arg2: memref<8x1xf32, #tpu.memory_space<vmem>>, %arg3: memref<8x256xf32, #tpu.memory_space<vmem>>, %arg4: memref<8x256xf32, #tpu.memory_space<vmem>>) attributes {dimension_semantics = [#tpu.dimension_semantics<parallel>, #tpu.dimension_semantics<parallel>], iteration_bounds = array<i64: 1, 1>, scalar_prefetch = 0 : i64, scratch_operands = 0 : i64, tpu.core_type = #tpu.core_type<tc>, window_params = [{transform_indices = @transform_0, window_bounds = array<i64: 8, 1>}, {transform_indices = @transform_1, window_bounds = array<i64: 8, 256>}, {transform_indices = @transform_2, window_bounds = array<i64: 8, 256>}]} {
    %c0 = arith.constant 0 : index
    %c0_0 = arith.constant 0 : index
    %0 = vector.load %arg2[%c0, %c0_0] : memref<8x1xf32, #tpu.memory_space<vmem>>, vector<8x1xf32>
    %c0_1 = arith.constant 0 : index
    %c0_2 = arith.constant 0 : index
    %1 = vector.load %arg3[%c0_1, %c0_2] : memref<8x256xf32, #tpu.memory_space<vmem>>, vector<8x256xf32>
    %2 = vector.broadcast %0 : vector<8x1xf32> to vector<8x256xf32>
    %3 = arith.mulf %2, %1 : vector<8x256xf32>
    %c0_3 = arith.constant 0 : index
    %c0_4 = arith.constant 0 : index
    %4 = vector.load %arg4[%c0_3, %c0_4] : memref<8x256xf32, #tpu.memory_space<vmem>>, vector<8x256xf32>
    tpu.vector_store %arg4[%c0_3, %c0_4], %3 {strides = array<i32>} : memref<8x256xf32, #tpu.memory_space<vmem>>, vector<8x256xf32>,
    return
  }
  func.func @transform_0(%arg0: i32, %arg1: i32) -> (i32, i32) {
    %c0_i32 = arith.constant 0 : i32
    %c0_i32_0 = arith.constant 0 : i32
    return %arg0, %c0_i32 : i32, i32
  }
  func.func @transform_1(%arg0: i32, %arg1: i32) -> (i32, i32) {
    %c0_i32 = arith.constant 0 : i32
    return %arg0, %arg1 : i32, i32
  }
  func.func @transform_2(%arg0: i32, %arg1: i32) -> (i32, i32) {
    %c0_i32 = arith.constant 0 : i32
    return %arg0, %arg1 : i32, i32
  }
}

</mosaic_0001>

<llo_original>
// kernel: tpu_custom_call.1
$region0: #{tpu_custom_call.1}
  #allocation0 [shape = 'u32[]', space=smem, size = 0x4, offset = 0x4, fixed_abs, tag = 'smem constant byte address 0x4 - core index']
  #allocation1 [shape = 'u32[144,128]{1,0:T(1,128)}', space=vmem, size = 0x12000, scoped, tag = 'internal scratch']
  %s0 = inlined_call_operand.vmem [shape: f32[8,1], index: 0, kind: input, shape index: {}]
  %s1 = inlined_call_operand.hbm [shape: f32[8,256], index: 1, kind: input, shape index: {}]
  %s2 = inlined_call_operand.hbm [shape: f32[8,256], index: 2, kind: output, shape index: {}]
  %s3 = sld [smem:[#allocation0]]
  $region22: #{tpu_custom_call.1} parent=0
    _
  %s5 = ssub.s32 1, %s3
  %s6 = scalar_select 0, %s5, %s3
  $region1: #{tpu_custom_call.1} parent=0
    #allocation2 [shape = 'u8[8192]{0}', space=vmem, size = 0x2000, scoped, tag = 'input window, operand 1, single buffered']
    #allocation3 [shape = 's32[1]{0}', space=sflag, size = 0x4, scoped, tag = 'scoped memory for tpu_custom_call.1']
    #allocation4 [shape = 's32[1]{0}', space=sflag, size = 0x4, scoped, tag = 'scoped memory for tpu_custom_call.1']
    #allocation5 [shape = 'u8[8192]{0}', space=vmem, size = 0x2000, scoped, tag = 'output window, operand 0, single buffered']
    %7 = vsyncpa [#allocation3], 0
    %8 = vsyncpa [#allocation4], 0
    // Predicated region
    $region2: #{tpu_custom_call.1} parent=1 // pred_check
      _
    $region3: #{tpu_custom_call.1} parent=1 // pred_check_branch
      %10 = sbr.rel (0) target = $region5
    $region4: #{tpu_custom_call.1} parent=1 // pred_region
      _
    $region5: #{tpu_custom_call.1} parent=1 // pred_fallthru
      _
    // Predicated region
    $region6: #{tpu_custom_call.1} parent=1 // pred_check
      _
    $region7: #{tpu_custom_call.1} parent=1 // pred_check_branch
      %12 = sbr.rel (0) target = $region9
    $region8: #{tpu_custom_call.1} parent=1 // pred_region
      %s14 = ssub.s32 256, 256
      %15 = vsyncadd [#allocation3], %s14
      %s17 = sshll.u32 [#allocation2], 4
      %s18 = int_to_ptr.vmem [resolvable:$true] %s17
      %20 = dma.hbm_to_vmem [thread:$0]  %s1, 256, %s18, [#allocation3]
    $region9: #{tpu_custom_call.1} parent=1 // pred_fallthru
      _
    // Predicated region
    $region10: #{tpu_custom_call.1} parent=1 // pred_check
      _
    $region11: #{tpu_custom_call.1} parent=1 // pred_check_branch
      %22 = sbr.rel (0) target = $region13
    $region12: #{tpu_custom_call.1} parent=1 // pred_region
      %23 = dma.done [#allocation3], 256
    $region13: #{tpu_custom_call.1} parent=1 // pred_fallthru
      _
    %v24 = vld [vmem:[%s0] sm:$0xff]
    %v25 = vld [vmem:[#allocation2] sm:$0xff]
    %v26 = vld [vmem:[#allocation2 + $0x8] sm:$0xff]
    %28 = vset.pattern.permute.xlu0 0
    %29 = vperm.xlu0 %28, %v24
    %v30 = vpop.permute.xlu0 %29
    %v32 = vmul.f32 %v30, %v25
    %v33 = vmul.f32 %v30, %v26
    %34 = vst [vmem:[#allocation5] sm:$0xff] %v32
    %35 = vst [vmem:[#allocation5 + $0x8] sm:$0xff] %v33
    // Predicated region
    $region14: #{tpu_custom_call.1} parent=1 // pred_check
      _
    $region15: #{tpu_custom_call.1} parent=1 // pred_check_branch
      %37 = sbr.rel (0) target = $region17
    $region16: #{tpu_custom_call.1} parent=1 // pred_region
      %s39 = ssub.s32 256, 256
      %40 = vsyncadd [#allocation4], %s39
      %s42 = sshll.u32 [#allocation5], 4
      %s43 = int_to_ptr.vmem [resolvable:$true] %s42
      %45 = dma.vmem_to_hbm [thread:$0]  %s43, 256, %s2, [#allocation4]
    $region17: #{tpu_custom_call.1} parent=1 // pred_fallthru
      _
    // Predicated region
    $region18: #{tpu_custom_call.1} parent=1 // pred_check
      _
    $region19: #{tpu_custom_call.1} parent=1 // pred_check_branch
      %47 = sbr.rel (0) target = $region21
    $region20: #{tpu_custom_call.1} parent=1 // pred_region
      %48 = dma.done [#allocation4], 256
    $region21: #{tpu_custom_call.1} parent=1 // pred_fallthru
      _
    %49 = vsyncpa [#allocation3], 1
    %50 = vsyncpa [#allocation4], 1

</llo_original>
